<compile_context>
chip_gen: v7x
topology: tpu7x:2x2x1
jax: 0.10.0
libtpu: 0.0.40
codegen_flags: <defaults>
</compile_context>

<pallas_src>
import functools

import numpy as np
import jax
import jax.numpy as jnp
from jax import lax
from jax.experimental import pallas as pl
from jax.experimental.pallas import tpu as pltpu


# ----------------------------- kernels ---------------------------------------


def _qkv_projection_kernel(mu_ref, sg_ref, wmu_ref, bmu_ref, wsg_ref, bsg_ref,
                           qm_ref, km_ref, vm_ref, qs_ref, ks_ref, vs_ref,
                           *, d_model):
    """(T, D) mu/sigma tiles -> q/k/v projections, one wide matmul per stream."""
    D = d_model
    qkv_mu = (jnp.dot(mu_ref[...], wmu_ref[...],
                      preferred_element_type=jnp.float32) + bmu_ref[...])
    qkv_sg = (jnp.dot(sg_ref[...], wsg_ref[...],
                      preferred_element_type=jnp.float32) + bsg_ref[...])
    # Static lane slices of the (T, 3D) results -> lane-dense (T, D) outputs.
    qm_ref[...] = qkv_mu[:, :D].astype(qm_ref.dtype)
    km_ref[...] = qkv_mu[:, D:2 * D].astype(km_ref.dtype)
    vm_ref[...] = qkv_mu[:, 2 * D:].astype(vm_ref.dtype)
    qs_ref[...] = qkv_sg[:, :D].astype(qs_ref.dtype)
    ks_ref[...] = qkv_sg[:, D:2 * D].astype(ks_ref.dtype)
    vs_ref[...] = qkv_sg[:, 2 * D:].astype(vs_ref.dtype)


def _wasserstein_flash_kernel(qm_ref, qs_ref, km_ref, ks_ref, vm_ref, vs_ref,
                              wo_ref, bo_ref, mu_out_ref, sg_out_ref,
                              accm_ref, accs_ref, l_ref, qsq_ref,
                              *, num_heads, head_dim, alpha):
    """One (batch, q_tile, k_tile) step of the fused Wasserstein attention."""
    ki = pl.program_id(2)
    dk = head_dim

    @pl.when(ki == 0)
    def _init():
        accm_ref[...] = jnp.zeros_like(accm_ref)
        accs_ref[...] = jnp.zeros_like(accs_ref)
        l_ref[...] = jnp.zeros_like(l_ref)
        # Hoisted q row-norms: computed once per (b, qi), reused for every ki.
        qm = qm_ref[...].astype(jnp.float32)
        qs = qs_ref[...].astype(jnp.float32)
        qq_full = qm * qm + qs * qs                               # (TQ, D)
        for h in range(num_heads):
            qsq_ref[h] = jnp.sum(qq_full[:, h * dk:(h + 1) * dk],
                                 axis=-1, keepdims=True)          # (TQ, 1)

    # Full-tile k squares computed once per step (shared by all heads).
    km_f = km_ref[...].astype(jnp.float32)
    ks_f = ks_ref[...].astype(jnp.float32)
    kk_full = km_f * km_f + ks_f * ks_f                           # (TK, D)
    ones_row = jnp.ones((1, dk), jnp.float32)

    for h in range(num_heads):
        sl = slice(h * dk, (h + 1) * dk)
        q_mu = qm_ref[:, sl]                                      # (TQ, dk)
        q_sg = qs_ref[:, sl]
        k_mu = km_ref[:, sl]                                      # (TK, dk)
        k_sg = ks_ref[:, sl]
        v_mu = vm_ref[:, sl]                                      # (TK, dk)
        v_sg = vs_ref[:, sl]

        # k row-norms as a (1, TK) row directly from the MXU (no XLU transpose).
        k_sq = lax.dot_general(ones_row, kk_full[:, sl],
                               (((1,), (1,)), ((), ())),
                               preferred_element_type=jnp.float32)  # (1, TK)
        # W^2 = ||q_mu - k_mu||^2 + ||q_sigma - k_sigma||^2 (expansion form).
        qk = (lax.dot_general(q_mu, k_mu, (((1,), (1,)), ((), ())),
                              preferred_element_type=jnp.float32)
              + lax.dot_general(q_sg, k_sg, (((1,), (1,)), ((), ())),
                                preferred_element_type=jnp.float32))  # (TQ, TK)
        d2 = jnp.maximum(qsq_ref[h] + k_sq - 2.0 * qk, 0.0)       # clamp round-off
        sim = jnp.exp(-alpha * jnp.sqrt(d2))                      # in (0, 1]
        # sim is bounded, so the softmax numerator needs no max-subtraction.
        # TODO(synk): on EUP-bound shapes, exp(sim) on sim in (0,1] could be a
        # degree-3/4 minimax polynomial on the VPU to cut one of three EUP ops.
        p = jnp.exp(sim)                                          # (TQ, TK)
        l_ref[h] = l_ref[h] + jnp.sum(p, axis=-1, keepdims=True)
        pv = p.astype(v_mu.dtype)
        accm_ref[h] = accm_ref[h] + jnp.dot(pv, v_mu,
                                            preferred_element_type=jnp.float32)
        accs_ref[h] = accs_ref[h] + jnp.dot(pv, v_sg,
                                            preferred_element_type=jnp.float32)

    @pl.when(ki == pl.num_programs(2) - 1)
    def _finalize():
        mu_res = jnp.zeros(mu_out_ref.shape, jnp.float32)
        sg_res = jnp.zeros(sg_out_ref.shape, jnp.float32)
        for h in range(num_heads):
            l = l_ref[h]                                          # (TQ, 1)
            # EUP approx-reciprocal seed + one Newton step (epilogue-only).
            inv_l = pl.reciprocal(l, approx=True)
            inv_l = inv_l * (2.0 - l * inv_l)
            w_h = wo_ref[h * dk:(h + 1) * dk, :]                  # dense (dk, D)
            hm = (accm_ref[h] * inv_l).astype(w_h.dtype)
            hs = (accs_ref[h] * inv_l).astype(w_h.dtype)
            mu_res = mu_res + jnp.dot(hm, w_h, preferred_element_type=jnp.float32)
            sg_res = sg_res + jnp.dot(hs, w_h, preferred_element_type=jnp.float32)
        bo = bo_ref[...].astype(jnp.float32)
        mu_out_ref[...] = (mu_res + bo).astype(mu_out_ref.dtype)
        sg_out_ref[...] = (sg_res + bo).astype(sg_out_ref.dtype)


# ----------------------------- glue / wrapper ---------------------------------


def _choose_tile(length, target):
    """Largest tile <= target that divides `length` and is a multiple of 8;
    falls back to the full length (single block) if none exists."""
    if length <= target:
        return length
    t = (target // 8) * 8
    while t >= 8:
        if length % t == 0:
            return t
        t -= 8
    return length


def _vmem_capacity_bytes():
    try:
        return int(pltpu.get_tpu_info().vmem_capacity_bytes)
    except Exception:
        return 64 << 20  # conservative: v7x per-TensorCore capacity


def _vmem_limit(io_bytes, resident_bytes, temp_bytes):
    """Scoped-VMEM request: double-buffered streamed tiles + resident weights /
    scratch (incl. lane padding) + vector temporaries + headroom, capped at 75%
    of physical VMEM (so 128-MiB v5e/v6e parts get more room than 64-MiB v7x)."""
    need = 2 * int(io_bytes) + int(resident_bytes) + int(temp_bytes) + (4 << 20)
    cap = (_vmem_capacity_bytes() * 3) // 4
    return int(min(max(need, 16 << 20), cap))


def multihead_wasserstein_attention(mu, sigma, params, num_heads, alpha=1.0, *,
                                    q_tile=512, k_tile=256,
                                    compute_dtype=jnp.bfloat16):
    bs, L, D = mu.shape
    assert D % num_heads == 0
    dk = D // num_heads
    itemsize = np.dtype(compute_dtype).itemsize

    # TODO(synk): production shapes should pad d_model to a multiple of 128 and
    # L to a multiple of 8 for fully lane/sublane-dense blocks; the tiny module
    # shapes here are exempt because full-dim blocks are used.

    w_mu = jnp.asarray(params["w_qkv_mu"], compute_dtype)          # (D, 3D)
    w_sg = jnp.asarray(params["w_qkv_sigma"], compute_dtype)       # (D, 3D)
    b_mu = jnp.asarray(params["b_qkv_mu"], jnp.float32).reshape(1, 3 * D)
    b_sg = jnp.asarray(params["b_qkv_sigma"], jnp.float32).reshape(1, 3 * D)
    w_out = jnp.asarray(params["w_out"], compute_dtype)            # (D, D) dense
    b_out = jnp.asarray(params["b_out"], jnp.float32).reshape(1, D)

    mu_c = mu.astype(compute_dtype)
    sg_c = sigma.astype(compute_dtype)

    tq = _choose_tile(L, q_tile)
    tk = _choose_tile(L, k_tile)

    # -------------------- stage 1: QKV projections --------------------------
    qkv_struct = jax.ShapeDtypeStruct((bs, L, D), compute_dtype)
    x_spec = pl.BlockSpec((None, tq, D), lambda b, t: (b, t, 0))
    w_spec = pl.BlockSpec((D, 3 * D), lambda b, t: (0, 0))          # resident
    b_spec = pl.BlockSpec((1, 3 * D), lambda b, t: (0, 0))
    out_spec1 = pl.BlockSpec((None, tq, D), lambda b, t: (b, t, 0))

    vmem1 = _vmem_limit(
        io_bytes=8 * tq * D * itemsize,                 # 2 input + 6 output tiles
        resident_bytes=2 * D * 3 * D * itemsize + 2 * 3 * D * 4,
        temp_bytes=2 * tq * 3 * D * 4)                  # f32 qkv_mu / qkv_sigma

    q_mu, k_mu, v_mu, q_sg, k_sg, v_sg = pl.pallas_call(
        functools.partial(_qkv_projection_kernel, d_model=D),
        grid=(bs, L // tq),
        in_specs=[x_spec, x_spec, w_spec, b_spec, w_spec, b_spec],
        out_specs=(out_spec1,) * 6,
        out_shape=(qkv_struct,) * 6,
        compiler_params=pltpu.CompilerParams(
            dimension_semantics=("parallel", "parallel"),
            vmem_limit_bytes=vmem1),
    )(mu_c, sg_c, w_mu, b_mu, w_sg, b_sg)

    # ------------- stage 2: flash attention + output projection --------------
    q_spec = pl.BlockSpec((None, tq, D), lambda b, qi, ki: (b, qi, 0))
    kv_spec = pl.BlockSpec((None, tk, D), lambda b, qi, ki: (b, ki, 0))
    wo_spec = pl.BlockSpec((D, D), lambda b, qi, ki: (0, 0))         # resident
    bo_spec = pl.BlockSpec((1, D), lambda b, qi, ki: (0, 0))
    out_spec = pl.BlockSpec((None, tq, D), lambda b, qi, ki: (b, qi, 0))

    vmem2 = _vmem_limit(
        io_bytes=(2 * tq * D * itemsize + 4 * tk * D * itemsize
                  + 2 * tq * D * 4),                    # q, k/v tiles + 2 outputs
        resident_bytes=(D * D * itemsize + D * 4        # W_out / b_out
                        + 2 * num_heads * tq * dk * 4   # mu/sigma accumulators
                        + 2 * num_heads * tq * 128 * 4),  # lane-padded l / q_sq
        temp_bytes=4 * tq * tk * 4)                     # qk / d2 / sim / p temps

    mu_out, sg_out = pl.pallas_call(
        functools.partial(_wasserstein_flash_kernel,
                          num_heads=num_heads, head_dim=dk, alpha=float(alpha)),
        grid=(bs, L // tq, L // tk),
        in_specs=[q_spec, q_spec, kv_spec, kv_spec, kv_spec, kv_spec,
                  wo_spec, bo_spec],
        out_specs=(out_spec, out_spec),
        out_shape=(jax.ShapeDtypeStruct((bs, L, D), jnp.float32),) * 2,
        scratch_shapes=[pltpu.VMEM((num_heads, tq, dk), jnp.float32),
                        pltpu.VMEM((num_heads, tq, dk), jnp.float32),
                        pltpu.VMEM((num_heads, tq, 1), jnp.float32),
                        pltpu.VMEM((num_heads, tq, 1), jnp.float32)],
        compiler_params=pltpu.CompilerParams(
            dimension_semantics=("parallel", "parallel", "arbitrary"),
            vmem_limit_bytes=vmem2),
    )(q_mu, q_sg, k_mu, k_sg, v_mu, v_sg, w_out, b_out)

    return mu_out, sg_out


# ----------------------------- reference & self-test --------------------------


def _reference(mu, sigma, params, num_heads, alpha=1.0):
    """Pure-JAX mirror of the PyTorch forward."""
    bs, L, D = mu.shape
    dk = D // num_heads
    qkv_mu = mu @ params["w_qkv_mu"] + params["b_qkv_mu"][0]
    qkv_s = sigma @ params["w_qkv_sigma"] + params["b_qkv_sigma"][0]

    def split_heads(t):
        return t.reshape(bs, L, num_heads, dk).transpose(0, 2, 1, 3)

    Qm, Km, Vm = (split_heads(qkv_mu[..., i * D:(i + 1) * D]) for i in range(3))
    Qs, Ks, Vs = (split_heads(qkv_s[..., i * D:(i + 1) * D]) for i in range(3))

    t1 = jnp.sum((Qm[:, :, :, None, :] - Km[:, :, None, :, :]) ** 2, axis=-1)
    t2 = jnp.sum(Qs[:, :, :, None, :] ** 2 + Ks[:, :, None, :, :] ** 2
                 - 2.0 * Qs[:, :, :, None, :] * Ks[:, :, None, :, :], axis=-1)
    w = jnp.sqrt(t1 + t2)
    attn = jax.nn.softmax(jnp.exp(-alpha * w), axis=-1)

    wm = jnp.einsum("bnij,bnjk->bnik", attn, Vm).transpose(0, 2, 1, 3).reshape(bs, L, D)
    ws = jnp.einsum("bnij,bnjk->bnik", attn, Vs).transpose(0, 2, 1, 3).reshape(bs, L, D)
    return (wm @ params["w_out"] + params["b_out"][0],
            ws @ params["w_out"] + params["b_out"][0])


def _make_params(key, d_model):
    bound = 1.0 / (d_model ** 0.5)
    ks = jax.random.split(key, 6)
    u = lambda kk, shape: jax.random.uniform(kk, shape, jnp.float32, -bound, bound)
    return {
        "w_qkv_mu": u(ks[0], (d_model, 3 * d_model)),
        "b_qkv_mu": u(ks[1], (1, 3 * d_model)),
        "w_qkv_sigma": u(ks[2], (d_model, 3 * d_model)),
        "b_qkv_sigma": u(ks[3], (1, 3 * d_model)),
        "w_out": u(ks[4], (d_model, d_model)),
        "b_out": u(ks[5], (1, d_model)),
    }
    # NOTE: mu_query/mu_key/mu_value/sigma_query/sigma_key/sigma_value exist in
    # __init__ but are unused by forward(), so they carry no parameters here.


if __name__ == "__main__":
    key = jax.random.PRNGKey(0)
    k_in, k_par, k_in2, k_par2 = jax.random.split(key, 4)

    # --- config A: exactly the module's shapes (bs=2, L=5, d_model=4, heads=2) ---
    bs, seq_len, d_model, num_heads, alpha = 2, 5, 4, 2, 1.0
    k_mu, k_sig = jax.random.split(k_in)
    mu = jax.random.normal(k_mu, (bs, seq_len, d_model), jnp.float32)
    sigma = jax.random.uniform(k_sig, (bs, seq_len, d_model), jnp.float32)
    params = _make_params(k_par, d_model)

    mu_attn, sigma_attn = multihead_wasserstein_attention(
        mu, sigma, params, num_heads, alpha=alpha, compute_dtype=jnp.float32)
    jax.block_until_ready((mu_attn, sigma_attn))
    ref_mu, ref_sigma = _reference(mu, sigma, params, num_heads, alpha=alpha)
    assert mu_attn.shape == (bs, seq_len, d_model)
    assert sigma_attn.shape == (bs, seq_len, d_model)
    assert jnp.allclose(mu_attn, ref_mu, atol=1e-3, rtol=1e-3)
    assert jnp.allclose(sigma_attn, ref_sigma, atol=1e-3, rtol=1e-3)

    # --- config B: exercises the tiled flash path (multiple q- and k-tiles) ---
    bs2, L2, D2, H2 = 2, 16, 8, 2
    k_mu2, k_sig2 = jax.random.split(k_in2)
    mu2 = jax.random.normal(k_mu2, (bs2, L2, D2), jnp.float32)
    sigma2 = jax.random.uniform(k_sig2, (bs2, L2, D2), jnp.float32)
    params2 = _make_params(k_par2, D2)
    mu2_attn, sig2_attn = multihead_wasserstein_attention(
        mu2, sigma2, params2, H2, alpha=alpha, q_tile=8, k_tile=8,
        compute_dtype=jnp.float32)
    jax.block_until_ready((mu2_attn, sig2_attn))
    ref_mu2, ref_sig2 = _reference(mu2, sigma2, params2, H2, alpha=alpha)
    assert jnp.allclose(mu2_attn, ref_mu2, atol=1e-3, rtol=1e-3)
    assert jnp.allclose(sig2_attn, ref_sig2, atol=1e-3, rtol=1e-3)

    # --- config C: default bf16 MXU operands (perf mode), f32 accumulation ---
    mu_bf, sig_bf = multihead_wasserstein_attention(
        mu, sigma, params, num_heads, alpha=alpha)
    jax.block_until_ready((mu_bf, sig_bf))
    assert jnp.allclose(mu_bf, ref_mu, atol=1e-1, rtol=1e-1)
    assert jnp.allclose(sig_bf, ref_sigma, atol=1e-1, rtol=1e-1)

    print("KERNEL_OK")
</pallas_src>

<mosaic_0001>
module attributes {stable_mosaic.version = 11 : i64} {
  func.func @_qkv_projection_kernel(%arg0: i32, %arg1: i32, %arg2: memref<1x5x4xf32, #tpu.memory_space<vmem>>, %arg3: memref<1x5x4xf32, #tpu.memory_space<vmem>>, %arg4: memref<4x12xf32, #tpu.memory_space<vmem>>, %arg5: memref<1x12xf32, #tpu.memory_space<vmem>>, %arg6: memref<4x12xf32, #tpu.memory_space<vmem>>, %arg7: memref<1x12xf32, #tpu.memory_space<vmem>>, %arg8: memref<1x5x4xf32, #tpu.memory_space<vmem>>, %arg9: memref<1x5x4xf32, #tpu.memory_space<vmem>>, %arg10: memref<1x5x4xf32, #tpu.memory_space<vmem>>, %arg11: memref<1x5x4xf32, #tpu.memory_space<vmem>>, %arg12: memref<1x5x4xf32, #tpu.memory_space<vmem>>, %arg13: memref<1x5x4xf32, #tpu.memory_space<vmem>>) attributes {dimension_semantics = [#tpu.dimension_semantics<parallel>, #tpu.dimension_semantics<parallel>], iteration_bounds = array<i64: 2, 1>, scalar_prefetch = 0 : i64, scratch_operands = 0 : i64, tpu.core_type = #tpu.core_type<tc>, window_params = [{transform_indices = @transform_0, window_bounds = array<i64: 1, 5, 4>}, {transform_indices = @transform_1, window_bounds = array<i64: 1, 5, 4>}, {pipeline_mode = #tpu.pipeline_mode<synchronous>, transform_indices = @transform_2, window_bounds = array<i64: 4, 12>}, {pipeline_mode = #tpu.pipeline_mode<synchronous>, transform_indices = @transform_3, window_bounds = array<i64: 1, 12>}, {pipeline_mode = #tpu.pipeline_mode<synchronous>, transform_indices = @transform_4, window_bounds = array<i64: 4, 12>}, {pipeline_mode = #tpu.pipeline_mode<synchronous>, transform_indices = @transform_5, window_bounds = array<i64: 1, 12>}, {transform_indices = @transform_6, window_bounds = array<i64: 1, 5, 4>}, {transform_indices = @transform_7, window_bounds = array<i64: 1, 5, 4>}, {transform_indices = @transform_8, window_bounds = array<i64: 1, 5, 4>}, {transform_indices = @transform_9, window_bounds = array<i64: 1, 5, 4>}, {transform_indices = @transform_10, window_bounds = array<i64: 1, 5, 4>}, {transform_indices = @transform_11, window_bounds = array<i64: 1, 5, 4>}]} {
    %c0 = arith.constant 0 : index
    %c0_0 = arith.constant 0 : index
    %c0_1 = arith.constant 0 : index
    %0 = vector.load %arg2[%c0, %c0_0, %c0_1] : memref<1x5x4xf32, #tpu.memory_space<vmem>>, vector<1x5x4xf32>
    %1 = vector.shape_cast %0 : vector<1x5x4xf32> to vector<5x4xf32>
    %c0_2 = arith.constant 0 : index
    %c0_3 = arith.constant 0 : index
    %2 = vector.load %arg4[%c0_2, %c0_3] : memref<4x12xf32, #tpu.memory_space<vmem>>, vector<4x12xf32>
    %cst = arith.constant dense<0.000000e+00> : vector<5x12xf32>
    %3 = tpu.matmul %1, %2, %cst {dimension_numbers = #tpu.dot_dimension_numbers<[1], [0], [0], [1], [0, 0, 1, 1], [], []>} : vector<5x4xf32>, vector<4x12xf32>, vector<5x12xf32> -> vector<5x12xf32>
    %c0_4 = arith.constant 0 : index
    %c0_5 = arith.constant 0 : index
    %4 = vector.load %arg5[%c0_4, %c0_5] : memref<1x12xf32, #tpu.memory_space<vmem>>, vector<1x12xf32>
    %5 = vector.broadcast %4 : vector<1x12xf32> to vector<5x12xf32>
    %6 = arith.addf %3, %5 : vector<5x12xf32>
    %c0_6 = arith.constant 0 : index
    %c0_7 = arith.constant 0 : index
    %c0_8 = arith.constant 0 : index
    %7 = vector.load %arg3[%c0_6, %c0_7, %c0_8] : memref<1x5x4xf32, #tpu.memory_space<vmem>>, vector<1x5x4xf32>
    %8 = vector.shape_cast %7 : vector<1x5x4xf32> to vector<5x4xf32>
    %c0_9 = arith.constant 0 : index
    %c0_10 = arith.constant 0 : index
    %9 = vector.load %arg6[%c0_9, %c0_10] : memref<4x12xf32, #tpu.memory_space<vmem>>, vector<4x12xf32>
    %cst_11 = arith.constant dense<0.000000e+00> : vector<5x12xf32>
    %10 = tpu.matmul %8, %9, %cst_11 {dimension_numbers = #tpu.dot_dimension_numbers<[1], [0], [0], [1], [0, 0, 1, 1], [], []>} : vector<5x4xf32>, vector<4x12xf32>, vector<5x12xf32> -> vector<5x12xf32>
    %c0_12 = arith.constant 0 : index
    %c0_13 = arith.constant 0 : index
    %11 = vector.load %arg7[%c0_12, %c0_13] : memref<1x12xf32, #tpu.memory_space<vmem>>, vector<1x12xf32>
    %12 = vector.broadcast %11 : vector<1x12xf32> to vector<5x12xf32>
    %13 = arith.addf %10, %12 : vector<5x12xf32>
    %14 = vector.extract_strided_slice %6 {offsets = [0, 0], sizes = [5, 4], strides = [1, 1]} : vector<5x12xf32> to vector<5x4xf32>
    %c0_14 = arith.constant 0 : index
    %c0_15 = arith.constant 0 : index
    %c0_16 = arith.constant 0 : index
    %15 = vector.load %arg8[%c0_14, %c0_15, %c0_16] : memref<1x5x4xf32, #tpu.memory_space<vmem>>, vector<1x5x4xf32>
    %16 = vector.shape_cast %15 : vector<1x5x4xf32> to vector<5x4xf32>
    %17 = vector.shape_cast %14 : vector<5x4xf32> to vector<1x5x4xf32>
    tpu.vector_store %arg8[%c0_14, %c0_15, %c0_16], %17 {strides = array<i32>} : memref<1x5x4xf32, #tpu.memory_space<vmem>>, vector<1x5x4xf32>,
    %18 = vector.extract_strided_slice %6 {offsets = [0, 4], sizes = [5, 4], strides = [1, 1]} : vector<5x12xf32> to vector<5x4xf32>
    %c0_17 = arith.constant 0 : index
    %c0_18 = arith.constant 0 : index
    %c0_19 = arith.constant 0 : index
    %19 = vector.load %arg9[%c0_17, %c0_18, %c0_19] : memref<1x5x4xf32, #tpu.memory_space<vmem>>, vector<1x5x4xf32>
    %20 = vector.shape_cast %19 : vector<1x5x4xf32> to vector<5x4xf32>
    %21 = vector.shape_cast %18 : vector<5x4xf32> to vector<1x5x4xf32>
    tpu.vector_store %arg9[%c0_17, %c0_18, %c0_19], %21 {strides = array<i32>} : memref<1x5x4xf32, #tpu.memory_space<vmem>>, vector<1x5x4xf32>,
    %22 = vector.extract_strided_slice %6 {offsets = [0, 8], sizes = [5, 4], strides = [1, 1]} : vector<5x12xf32> to vector<5x4xf32>
    %c0_20 = arith.constant 0 : index
    %c0_21 = arith.constant 0 : index
    %c0_22 = arith.constant 0 : index
    %23 = vector.load %arg10[%c0_20, %c0_21, %c0_22] : memref<1x5x4xf32, #tpu.memory_space<vmem>>, vector<1x5x4xf32>
    %24 = vector.shape_cast %23 : vector<1x5x4xf32> to vector<5x4xf32>
    %25 = vector.shape_cast %22 : vector<5x4xf32> to vector<1x5x4xf32>
    tpu.vector_store %arg10[%c0_20, %c0_21, %c0_22], %25 {strides = array<i32>} : memref<1x5x4xf32, #tpu.memory_space<vmem>>, vector<1x5x4xf32>,
    %26 = vector.extract_strided_slice %13 {offsets = [0, 0], sizes = [5, 4], strides = [1, 1]} : vector<5x12xf32> to vector<5x4xf32>
    %c0_23 = arith.constant 0 : index
    %c0_24 = arith.constant 0 : index
    %c0_25 = arith.constant 0 : index
    %27 = vector.load %arg11[%c0_23, %c0_24, %c0_25] : memref<1x5x4xf32, #tpu.memory_space<vmem>>, vector<1x5x4xf32>
    %28 = vector.shape_cast %27 : vector<1x5x4xf32> to vector<5x4xf32>
    %29 = vector.shape_cast %26 : vector<5x4xf32> to vector<1x5x4xf32>
    tpu.vector_store %arg11[%c0_23, %c0_24, %c0_25], %29 {strides = array<i32>} : memref<1x5x4xf32, #tpu.memory_space<vmem>>, vector<1x5x4xf32>,
    %30 = vector.extract_strided_slice %13 {offsets = [0, 4], sizes = [5, 4], strides = [1, 1]} : vector<5x12xf32> to vector<5x4xf32>
    %c0_26 = arith.constant 0 : index
    %c0_27 = arith.constant 0 : index
    %c0_28 = arith.constant 0 : index
    %31 = vector.load %arg12[%c0_26, %c0_27, %c0_28] : memref<1x5x4xf32, #tpu.memory_space<vmem>>, vector<1x5x4xf32>
    %32 = vector.shape_cast %31 : vector<1x5x4xf32> to vector<5x4xf32>
    %33 = vector.shape_cast %30 : vector<5x4xf32> to vector<1x5x4xf32>
    tpu.vector_store %arg12[%c0_26, %c0_27, %c0_28], %33 {strides = array<i32>} : memref<1x5x4xf32, #tpu.memory_space<vmem>>, vector<1x5x4xf32>,
    %34 = vector.extract_strided_slice %13 {offsets = [0, 8], sizes = [5, 4], strides = [1, 1]} : vector<5x12xf32> to vector<5x4xf32>
    %c0_29 = arith.constant 0 : index
    %c0_30 = arith.constant 0 : index
    %c0_31 = arith.constant 0 : index
    %35 = vector.load %arg13[%c0_29, %c0_30, %c0_31] : memref<1x5x4xf32, #tpu.memory_space<vmem>>, vector<1x5x4xf32>
    %36 = vector.shape_cast %35 : vector<1x5x4xf32> to vector<5x4xf32>
    %37 = vector.shape_cast %34 : vector<5x4xf32> to vector<1x5x4xf32>
    tpu.vector_store %arg13[%c0_29, %c0_30, %c0_31], %37 {strides = array<i32>} : memref<1x5x4xf32, #tpu.memory_space<vmem>>, vector<1x5x4xf32>,
    return
  }
  func.func @transform_0(%arg0: i32, %arg1: i32) -> (i32, i32, i32) {
    %c0_i32 = arith.constant 0 : i32
    %c0_i32_0 = arith.constant 0 : i32
    return %arg0, %arg1, %c0_i32 : i32, i32, i32
  }
  func.func @transform_1(%arg0: i32, %arg1: i32) -> (i32, i32, i32) {
    %c0_i32 = arith.constant 0 : i32
    %c0_i32_0 = arith.constant 0 : i32
    return %arg0, %arg1, %c0_i32 : i32, i32, i32
  }
  func.func @transform_2(%arg0: i32, %arg1: i32) -> (i32, i32) {
    %c0_i32 = arith.constant 0 : i32
    %c0_i32_0 = arith.constant 0 : i32
    %c0_i32_1 = arith.constant 0 : i32
    return %c0_i32, %c0_i32_0 : i32, i32
  }
  func.func @transform_3(%arg0: i32, %arg1: i32) -> (i32, i32) {
    %c0_i32 = arith.constant 0 : i32
    %c0_i32_0 = arith.constant 0 : i32
    %c0_i32_1 = arith.constant 0 : i32
    return %c0_i32, %c0_i32_0 : i32, i32
  }
  func.func @transform_4(%arg0: i32, %arg1: i32) -> (i32, i32) {
    %c0_i32 = arith.constant 0 : i32
    %c0_i32_0 = arith.constant 0 : i32
    %c0_i32_1 = arith.constant 0 : i32
    return %c0_i32, %c0_i32_0 : i32, i32
  }
  func.func @transform_5(%arg0: i32, %arg1: i32) -> (i32, i32) {
    %c0_i32 = arith.constant 0 : i32
    %c0_i32_0 = arith.constant 0 : i32
    %c0_i32_1 = arith.constant 0 : i32
    return %c0_i32, %c0_i32_0 : i32, i32
  }
  func.func @transform_6(%arg0: i32, %arg1: i32) -> (i32, i32, i32) {
    %c0_i32 = arith.constant 0 : i32
    %c0_i32_0 = arith.constant 0 : i32
    return %arg0, %arg1, %c0_i32 : i32, i32, i32
  }
  func.func @transform_7(%arg0: i32, %arg1: i32) -> (i32, i32, i32) {
    %c0_i32 = arith.constant 0 : i32
    %c0_i32_0 = arith.constant 0 : i32
    return %arg0, %arg1, %c0_i32 : i32, i32, i32
  }
  func.func @transform_8(%arg0: i32, %arg1: i32) -> (i32, i32, i32) {
    %c0_i32 = arith.constant 0 : i32
    %c0_i32_0 = arith.constant 0 : i32
    return %arg0, %arg1, %c0_i32 : i32, i32, i32
  }
  func.func @transform_9(%arg0: i32, %arg1: i32) -> (i32, i32, i32) {
    %c0_i32 = arith.constant 0 : i32
    %c0_i32_0 = arith.constant 0 : i32
    return %arg0, %arg1, %c0_i32 : i32, i32, i32
  }
  func.func @transform_10(%arg0: i32, %arg1: i32) -> (i32, i32, i32) {
    %c0_i32 = arith.constant 0 : i32
    %c0_i32_0 = arith.constant 0 : i32
    return %arg0, %arg1, %c0_i32 : i32, i32, i32
  }
  func.func @transform_11(%arg0: i32, %arg1: i32) -> (i32, i32, i32) {
    %c0_i32 = arith.constant 0 : i32
    %c0_i32_0 = arith.constant 0 : i32
    return %arg0, %arg1, %c0_i32 : i32, i32, i32
  }
}

</mosaic_0001>

<llo_original>
// kernel: tpu_custom_call.1
$region0: #{tpu_custom_call.1}
  #allocation0 [shape = 'u32[]', space=smem, size = 0x4, offset = 0x4, fixed_abs, tag = 'smem constant byte address 0x4 - core index']
  #allocation1 [shape = 'u32[144,128]{1,0:T(1,128)}', space=vmem, size = 0x12000, scoped, tag = 'internal scratch']
  %s0 = inlined_call_operand.vmem [shape: f32[2,5,4], index: 0, kind: input, shape index: {}]
  %s1 = inlined_call_operand.vmem [shape: f32[2,5,4], index: 1, kind: input, shape index: {}]
  %s2 = inlined_call_operand.vmem [shape: f32[4,12], index: 2, kind: input, shape index: {}]
  %s3 = inlined_call_operand.vmem [shape: f32[1,12], index: 3, kind: input, shape index: {}]
  %s4 = inlined_call_operand.vmem [shape: f32[4,12], index: 4, kind: input, shape index: {}]
  %s5 = inlined_call_operand.vmem [shape: f32[1,12], index: 5, kind: input, shape index: {}]
  %s6 = inlined_call_operand.vmem [shape: f32[2,5,4], index: 6, kind: output, shape index: {0}]
  %s7 = inlined_call_operand.vmem [shape: f32[2,5,4], index: 7, kind: output, shape index: {1}]
  %s8 = inlined_call_operand.vmem [shape: f32[2,5,4], index: 8, kind: output, shape index: {2}]
  %s9 = inlined_call_operand.vmem [shape: f32[2,5,4], index: 9, kind: output, shape index: {3}]
  %s10 = inlined_call_operand.vmem [shape: f32[2,5,4], index: 10, kind: output, shape index: {4}]
  %s11 = inlined_call_operand.vmem [shape: f32[2,5,4], index: 11, kind: output, shape index: {5}]
  %12 = xla_tuple %s6, %s7, %s8, %s9, %s10, %s11
  %s13 = sld [smem:[#allocation0]]
  $region97: #{tpu_custom_call.1} parent=0
    _
  %s15 = ssub.s32 1, %s13
  %s16 = scalar_select 0, %s15, %s13
  loop: start=0, step=1, limit=4
  $region2: #{tpu_custom_call.1} parent=0 // loop_pre_header
    _
  $region3: #{tpu_custom_call.1} parent=0 // loop_header
    %s18 = sphi 0, %s22
    %p19 = scmp.ge.s32.totalorder %s18, 4
    %s25 = sphi 0, %s37
    %s26 = sphi 0, %s33
    %s27 = sphi 0, %s25
    %s28 = sphi 0, %s26
    %s29 = sphi 0, %s27
    %s30 = sphi 0, %s28
    %s42 = sphi 0, %s44
    %s45 = sphi 0, %s42
    %s46 = sphi 0, %s45
    %s62 = sphi 0, %s46
    %s70 = sphi 0, %s72
    %s73 = sphi 0, %s70
    %s74 = sphi 0, %s73
    %s90 = sphi 0, %s74
    %s94 = sphi 0, %s94
    %s96 = sphi 0, %s94
    %s97 = sphi 0, %s96
    %s111 = sphi 0, %s97
    %s115 = sphi 0, %s115
    %s117 = sphi 0, %s115
    %s118 = sphi 0, %s117
    %s132 = sphi 0, %s118
    %s136 = sphi 0, %s136
    %s138 = sphi 0, %s136
    %s139 = sphi 0, %s138
    %s153 = sphi 0, %s139
    %s157 = sphi 0, %s157
    %s159 = sphi 0, %s157
    %s160 = sphi 0, %s159
    %s174 = sphi 0, %s160
    %s182 = sphi 0, %s184
    %s185 = sphi 0, %s182
    %s186 = sphi 0, %s185
    %s202 = sphi 0, %s186
    %s210 = sphi 0, %s212
    %s213 = sphi 0, %s210
    %s214 = sphi 0, %s213
    %s230 = sphi 0, %s214
    %s238 = sphi 0, %s240
    %s241 = sphi 0, %s238
    %s242 = sphi 0, %s241
    %s258 = sphi 0, %s242
    %s266 = sphi 0, %s268
    %s269 = sphi 0, %s266
    %s270 = sphi 0, %s269
    %s286 = sphi 0, %s270
    %s294 = sphi 0, %s296
    %s297 = sphi 0, %s294
    %s298 = sphi 0, %s297
    %s314 = sphi 0, %s298
    %s322 = sphi 0, %s324
    %s325 = sphi 0, %s322
    %s326 = sphi 0, %s325
    %s342 = sphi 0, %s326
  $region4: #{tpu_custom_call.1} parent=0 // loop_header_branch
    %21 = sbr.rel (%p19) target = $region8
  $region5: #{tpu_custom_call.1} parent=0 // loop_body
    %s23 = ssub.s32 %s18, 1
    %s24 = ssub.s32 %s18, 2
    %s31 = sadd.s32 1, %s26
    %p32 = scmp.ge.s32.totalorder %s31, 1
    %s33 = scalar_select %p32, 0, %s31
    %s34 = sadd.s32 1, %s25
    %s35 = scalar_select %p32, %s34, %s25
    %p36 = scmp.ge.s32.totalorder %s35, 2
    %s37 = scalar_select %p36, 0, %s35
    %s38 = ssub.s32 %s25, %s37
    %s39 = ssub.s32 %s26, %s33
    %s40 = sor.u32 %s38, %s39
    %p41 = scmp.eq.s32.totalorder %s40, 0
    %s43 = sadd.s32 %s42, 1
    %s44 = scalar_select %p41, %s42, %s43
    %p47 = pneg %p41
    %p48 = scmp.eq.s32.totalorder %s18, 1
    %p49 = por %p47, %p48
    %p50 = scmp.ne.s32.totalorder %s42, %s45
    %p51 = scmp.eq.s32.totalorder %s18, 0
    %p52 = por %p50, %p51
    %p53 = scmp.ne.s32.totalorder %s42, %s45
    %p54 = scmp.eq.s32.totalorder %s23, 1
    %p55 = por %p53, %p54
    %p56 = scmp.ne.s32.totalorder %s45, %s46
    %p57 = scmp.eq.s32.totalorder %s23, 0
    %p58 = por %p56, %p57
    %p59 = scmp.ne.s32.totalorder %s45, %s46
    %p60 = scmp.eq.s32.totalorder %s24, 1
    %p61 = por %p59, %p60
    %p63 = scmp.ne.s32.totalorder %s46, %s62
    %p64 = scmp.eq.s32.totalorder %s24, 0
    %p65 = por %p63, %p64
    %s66 = ssub.s32 %s25, %s37
    %s67 = ssub.s32 %s26, %s33
    %s68 = sor.u32 %s66, %s67
    %p69 = scmp.eq.s32.totalorder %s68, 0
    %s71 = sadd.s32 %s70, 1
    %s72 = scalar_select %p69, %s70, %s71
    %p75 = pneg %p69
    %p76 = scmp.eq.s32.totalorder %s18, 1
    %p77 = por %p75, %p76
    %p78 = scmp.ne.s32.totalorder %s70, %s73
    %p79 = scmp.eq.s32.totalorder %s18, 0
    %p80 = por %p78, %p79
    %p81 = scmp.ne.s32.totalorder %s70, %s73
    %p82 = scmp.eq.s32.totalorder %s23, 1
    %p83 = por %p81, %p82
    %p84 = scmp.ne.s32.totalorder %s73, %s74
    %p85 = scmp.eq.s32.totalorder %s23, 0
    %p86 = por %p84, %p85
    %p87 = scmp.ne.s32.totalorder %s73, %s74
    %p88 = scmp.eq.s32.totalorder %s24, 1
    %p89 = por %p87, %p88
    %p91 = scmp.ne.s32.totalorder %s74, %s90
    %p92 = scmp.eq.s32.totalorder %s24, 0
    %p93 = por %p91, %p92
    %s95 = sadd.s32 %s94, 1
    %p98 = scmp.eq.s32.totalorder %s18, 1
    %p99 = scmp.ne.s32.totalorder %s94, %s96
    %p100 = scmp.eq.s32.totalorder %s18, 0
    %p101 = por %p99, %p100
    %p102 = scmp.ne.s32.totalorder %s94, %s96
    %p103 = scmp.eq.s32.totalorder %s23, 1
    %p104 = por %p102, %p103
    %p105 = scmp.ne.s32.totalorder %s96, %s97
    %p106 = scmp.eq.s32.totalorder %s23, 0
    %p107 = por %p105, %p106
    %p108 = scmp.ne.s32.totalorder %s96, %s97
    %p109 = scmp.eq.s32.totalorder %s24, 1
    %p110 = por %p108, %p109
    %p112 = scmp.ne.s32.totalorder %s97, %s111
    %p113 = scmp.eq.s32.totalorder %s24, 0
    %p114 = por %p112, %p113
    %s116 = sadd.s32 %s115, 1
    %p119 = scmp.eq.s32.totalorder %s18, 1
    %p120 = scmp.ne.s32.totalorder %s115, %s117
    %p121 = scmp.eq.s32.totalorder %s18, 0
    %p122 = por %p120, %p121
    %p123 = scmp.ne.s32.totalorder %s115, %s117
    %p124 = scmp.eq.s32.totalorder %s23, 1
    %p125 = por %p123, %p124
    %p126 = scmp.ne.s32.totalorder %s117, %s118
    %p127 = scmp.eq.s32.totalorder %s23, 0
    %p128 = por %p126, %p127
    %p129 = scmp.ne.s32.totalorder %s117, %s118
    %p130 = scmp.eq.s32.totalorder %s24, 1
    %p131 = por %p129, %p130
    %p133 = scmp.ne.s32.totalorder %s118, %s132
    %p134 = scmp.eq.s32.totalorder %s24, 0
    %p135 = por %p133, %p134
    %s137 = sadd.s32 %s136, 1
    %p140 = scmp.eq.s32.totalorder %s18, 1
    %p141 = scmp.ne.s32.totalorder %s136, %s138
    %p142 = scmp.eq.s32.totalorder %s18, 0
    %p143 = por %p141, %p142
    %p144 = scmp.ne.s32.totalorder %s136, %s138
    %p145 = scmp.eq.s32.totalorder %s23, 1
    %p146 = por %p144, %p145
    %p147 = scmp.ne.s32.totalorder %s138, %s139
    %p148 = scmp.eq.s32.totalorder %s23, 0
    %p149 = por %p147, %p148
    %p150 = scmp.ne.s32.totalorder %s138, %s139
    %p151 = scmp.eq.s32.totalorder %s24, 1
    %p152 = por %p150, %p151
    %p154 = scmp.ne.s32.totalorder %s139, %s153
    %p155 = scmp.eq.s32.totalorder %s24, 0
    %p156 = por %p154, %p155
    %s158 = sadd.s32 %s157, 1
    %p161 = scmp.eq.s32.totalorder %s18, 1
    %p162 = scmp.ne.s32.totalorder %s157, %s159
    %p163 = scmp.eq.s32.totalorder %s18, 0
    %p164 = por %p162, %p163
    %p165 = scmp.ne.s32.totalorder %s157, %s159
    %p166 = scmp.eq.s32.totalorder %s23, 1
    %p167 = por %p165, %p166
    %p168 = scmp.ne.s32.totalorder %s159, %s160
    %p169 = scmp.eq.s32.totalorder %s23, 0
    %p170 = por %p168, %p169
    %p171 = scmp.ne.s32.totalorder %s159, %s160
    %p172 = scmp.eq.s32.totalorder %s24, 1
    %p173 = por %p171, %p172
    %p175 = scmp.ne.s32.totalorder %s160, %s174
    %p176 = scmp.eq.s32.totalorder %s24, 0
    %p177 = por %p175, %p176
    %s178 = ssub.s32 %s25, %s37
    %s179 = ssub.s32 %s26, %s33
    %s180 = sor.u32 %s178, %s179
    %p181 = scmp.eq.s32.totalorder %s180, 0
    %s183 = sadd.s32 %s182, 1
    %s184 = scalar_select %p181, %s182, %s183
    %p187 = pneg %p181
    %p188 = scmp.eq.s32.totalorder %s18, 1
    %p189 = por %p187, %p188
    %p190 = scmp.ne.s32.totalorder %s182, %s185
    %p191 = scmp.eq.s32.totalorder %s18, 0
    %p192 = por %p190, %p191
    %p193 = scmp.ne.s32.totalorder %s182, %s185
    %p194 = scmp.eq.s32.totalorder %s23, 1
    %p195 = por %p193, %p194
    %p196 = scmp.ne.s32.totalorder %s185, %s186
    %p197 = scmp.eq.s32.totalorder %s23, 0
    %p198 = por %p196, %p197
    %p199 = scmp.ne.s32.totalorder %s185, %s186
    %p200 = scmp.eq.s32.totalorder %s24, 1
    %p201 = por %p199, %p200
    %p203 = scmp.ne.s32.totalorder %s186, %s202
    %p204 = scmp.eq.s32.totalorder %s24, 0
    %p205 = por %p203, %p204
    %s206 = ssub.s32 %s25, %s37
    %s207 = ssub.s32 %s26, %s33
    %s208 = sor.u32 %s206, %s207
    %p209 = scmp.eq.s32.totalorder %s208, 0
    %s211 = sadd.s32 %s210, 1
    %s212 = scalar_select %p209, %s210, %s211
    %p215 = pneg %p209
    %p216 = scmp.eq.s32.totalorder %s18, 1
    %p217 = por %p215, %p216
    %p218 = scmp.ne.s32.totalorder %s210, %s213
    %p219 = scmp.eq.s32.totalorder %s18, 0
    %p220 = por %p218, %p219
    %p221 = scmp.ne.s32.totalorder %s210, %s213
    %p222 = scmp.eq.s32.totalorder %s23, 1
    %p223 = por %p221, %p222
    %p224 = scmp.ne.s32.totalorder %s213, %s214
    %p225 = scmp.eq.s32.totalorder %s23, 0
    %p226 = por %p224, %p225
    %p227 = scmp.ne.s32.totalorder %s213, %s214
    %p228 = scmp.eq.s32.totalorder %s24, 1
    %p229 = por %p227, %p228
    %p231 = scmp.ne.s32.totalorder %s214, %s230
    %p232 = scmp.eq.s32.totalorder %s24, 0
    %p233 = por %p231, %p232
    %s234 = ssub.s32 %s25, %s37
    %s235 = ssub.s32 %s26, %s33
    %s236 = sor.u32 %s234, %s235
    %p237 = scmp.eq.s32.totalorder %s236, 0
    %s239 = sadd.s32 %s238, 1
    %s240 = scalar_select %p237, %s238, %s239
    %p243 = pneg %p237
    %p244 = scmp.eq.s32.totalorder %s18, 1
    %p245 = por %p243, %p244
    %p246 = scmp.ne.s32.totalorder %s238, %s241
    %p247 = scmp.eq.s32.totalorder %s18, 0
    %p248 = por %p246, %p247
    %p249 = scmp.ne.s32.totalorder %s238, %s241
    %p250 = scmp.eq.s32.totalorder %s23, 1
    %p251 = por %p249, %p250
    %p252 = scmp.ne.s32.totalorder %s241, %s242
    %p253 = scmp.eq.s32.totalorder %s23, 0
    %p254 = por %p252, %p253
    %p255 = scmp.ne.s32.totalorder %s241, %s242
    %p256 = scmp.eq.s32.totalorder %s24, 1
    %p257 = por %p255, %p256
    %p259 = scmp.ne.s32.totalorder %s242, %s258
    %p260 = scmp.eq.s32.totalorder %s24, 0
    %p261 = por %p259, %p260
    %s262 = ssub.s32 %s25, %s37
    %s263 = ssub.s32 %s26, %s33
    %s264 = sor.u32 %s262, %s263
    %p265 = scmp.eq.s32.totalorder %s264, 0
    %s267 = sadd.s32 %s266, 1
    %s268 = scalar_select %p265, %s266, %s267
    %p271 = pneg %p265
    %p272 = scmp.eq.s32.totalorder %s18, 1
    %p273 = por %p271, %p272
    %p274 = scmp.ne.s32.totalorder %s266, %s269
    %p275 = scmp.eq.s32.totalorder %s18, 0
    %p276 = por %p274, %p275
    %p277 = scmp.ne.s32.totalorder %s266, %s269
    %p278 = scmp.eq.s32.totalorder %s23, 1
    %p279 = por %p277, %p278
    %p280 = scmp.ne.s32.totalorder %s269, %s270
    %p281 = scmp.eq.s32.totalorder %s23, 0
    %p282 = por %p280, %p281
    %p283 = scmp.ne.s32.totalorder %s269, %s270
    %p284 = scmp.eq.s32.totalorder %s24, 1
    %p285 = por %p283, %p284
    %p287 = scmp.ne.s32.totalorder %s270, %s286
    %p288 = scmp.eq.s32.totalorder %s24, 0
    %p289 = por %p287, %p288
    %s290 = ssub.s32 %s25, %s37
    %s291 = ssub.s32 %s26, %s33
    %s292 = sor.u32 %s290, %s291
    %p293 = scmp.eq.s32.totalorder %s292, 0
    %s295 = sadd.s32 %s294, 1
    %s296 = scalar_select %p293, %s294, %s295
    %p299 = pneg %p293
    %p300 = scmp.eq.s32.totalorder %s18, 1
    %p301 = por %p299, %p300
    %p302 = scmp.ne.s32.totalorder %s294, %s297
    %p303 = scmp.eq.s32.totalorder %s18, 0
    %p304 = por %p302, %p303
    %p305 = scmp.ne.s32.totalorder %s294, %s297
    %p306 = scmp.eq.s32.totalorder %s23, 1
    %p307 = por %p305, %p306
    %p308 = scmp.ne.s32.totalorder %s297, %s298
    %p309 = scmp.eq.s32.totalorder %s23, 0
    %p310 = por %p308, %p309
    %p311 = scmp.ne.s32.totalorder %s297, %s298
    %p312 = scmp.eq.s32.totalorder %s24, 1
    %p313 = por %p311, %p312
    %p315 = scmp.ne.s32.totalorder %s298, %s314
    %p316 = scmp.eq.s32.totalorder %s24, 0
    %p317 = por %p315, %p316
    %s318 = ssub.s32 %s25, %s37
    %s319 = ssub.s32 %s26, %s33
    %s320 = sor.u32 %s318, %s319
    %p321 = scmp.eq.s32.totalorder %s320, 0
    %s323 = sadd.s32 %s322, 1
    %s324 = scalar_select %p321, %s322, %s323
    %p327 = pneg %p321
    %p328 = scmp.eq.s32.totalorder %s18, 1
    %p329 = por %p327, %p328
    %p330 = scmp.ne.s32.totalorder %s322, %s325
    %p331 = scmp.eq.s32.totalorder %s18, 0
    %p332 = por %p330, %p331
    %p333 = scmp.ne.s32.totalorder %s322, %s325
    %p334 = scmp.eq.s32.totalorder %s23, 1
    %p335 = por %p333, %p334
    %p336 = scmp.ne.s32.totalorder %s325, %s326
    %p337 = scmp.eq.s32.totalorder %s23, 0
    %p338 = por %p336, %p337
    %p339 = scmp.ne.s32.totalorder %s325, %s326
    %p340 = scmp.eq.s32.totalorder %s24, 1
    %p341 = por %p339, %p340
    %p343 = scmp.ne.s32.totalorder %s326, %s342
    %p344 = scmp.eq.s32.totalorder %s24, 0
    %p345 = por %p343, %p344
    %p346 = scmp.le.s32.totalorder 1, %s18
    %p347 = scmp.lt.s32.totalorder %s18, 3
    %p348 = pnand %p346, %p347
    %p349 = pneg %p348
    // Predicated region
    $region9: #{tpu_custom_call.1} parent=5 // pred_check
      _
    $region10: #{tpu_custom_call.1} parent=5 // pred_check_branch
      %351 = sbr.rel (%p348) target = $region12
    $region11: #{tpu_custom_call.1} parent=5 // pred_region
      %s352 = ssub.s32 %s18, 1
      // Predicated region
      $region13: #{tpu_custom_call.1} parent=11 // pred_check
        %p353 = pneg %p107
      $region14: #{tpu_custom_call.1} parent=11 // pred_check_branch
        %355 = sbr.rel (%p353) target = $region16
      $region15: #{tpu_custom_call.1} parent=11 // pred_region
        _
      $region16: #{tpu_custom_call.1} parent=11 // pred_fallthru
        _
      // Predicated region
      $region17: #{tpu_custom_call.1} parent=11 // pred_check
        %p356 = pneg %p128
      $region18: #{tpu_custom_call.1} parent=11 // pred_check_branch
        %358 = sbr.rel (%p356) target = $region20
      $region19: #{tpu_custom_call.1} parent=11 // pred_region
        _
      $region20: #{tpu_custom_call.1} parent=11 // pred_fallthru
        _
      // Predicated region
      $region21: #{tpu_custom_call.1} parent=11 // pred_check
        %p359 = pneg %p149
      $region22: #{tpu_custom_call.1} parent=11 // pred_check_branch
        %361 = sbr.rel (%p359) target = $region24
      $region23: #{tpu_custom_call.1} parent=11 // pred_region
        _
      $region24: #{tpu_custom_call.1} parent=11 // pred_fallthru
        _
      // Predicated region
      $region25: #{tpu_custom_call.1} parent=11 // pred_check
        %p362 = pneg %p170
      $region26: #{tpu_custom_call.1} parent=11 // pred_check_branch
        %364 = sbr.rel (%p362) target = $region28
      $region27: #{tpu_custom_call.1} parent=11 // pred_region
        _
      $region28: #{tpu_custom_call.1} parent=11 // pred_fallthru
        _
    $region12: #{tpu_custom_call.1} parent=5 // pred_fallthru
      _
    %p365 = scmp.lt.s32.totalorder %s18, 2
    // Predicated region
    $region29: #{tpu_custom_call.1} parent=5 // pred_check
      %p366 = pneg %p365
    $region30: #{tpu_custom_call.1} parent=5 // pred_check_branch
      %368 = sbr.rel (%p366) target = $region32
    $region31: #{tpu_custom_call.1} parent=5 // pred_region
      // Predicated region
      $region33: #{tpu_custom_call.1} parent=31 // pred_check
        %p369 = pneg %p52
      $region34: #{tpu_custom_call.1} parent=31 // pred_check_branch
        %371 = sbr.rel (%p369) target = $region36
      $region35: #{tpu_custom_call.1} parent=31 // pred_region
        %p372 = scmp.lt.s32.totalorder %s25, 1
        %s373 = scalar_select %p372, %s25, 1
        %p374 = scmp.lt.s32.totalorder %s26, 0
        %s375 = scalar_select %p374, %s26, 0
        %s376 = sadd.s32 %s375, %s373
        %s377 = smul.addr %s376, 8
        %s378 = scalar_lea.vmem %s0, %s377
      $region36: #{tpu_custom_call.1} parent=31 // pred_fallthru
        _
      // Predicated region
      $region37: #{tpu_custom_call.1} parent=31 // pred_check
        %p379 = pneg %p80
      $region38: #{tpu_custom_call.1} parent=31 // pred_check_branch
        %381 = sbr.rel (%p379) target = $region40
      $region39: #{tpu_custom_call.1} parent=31 // pred_region
        %p382 = scmp.lt.s32.totalorder %s25, 1
        %s383 = scalar_select %p382, %s25, 1
        %p384 = scmp.lt.s32.totalorder %s26, 0
        %s385 = scalar_select %p384, %s26, 0
        %s386 = sadd.s32 %s385, %s383
        %s387 = smul.addr %s386, 8
        %s388 = scalar_lea.vmem %s1, %s387
      $region40: #{tpu_custom_call.1} parent=31 // pred_fallthru
        _
    $region32: #{tpu_custom_call.1} parent=5 // pred_fallthru
      _
    %p389 = scmp.le.s32.totalorder 1, %s18
    %p390 = scmp.lt.s32.totalorder %s18, 3
    %p391 = pnand %p389, %p390
    %p392 = pneg %p391
    // Predicated region
    $region41: #{tpu_custom_call.1} parent=5 // pred_check
      _
    $region42: #{tpu_custom_call.1} parent=5 // pred_check_branch
      %394 = sbr.rel (%p391) target = $region44
    $region43: #{tpu_custom_call.1} parent=5 // pred_region
      %s395 = ssub.s32 %s18, 1
      %p396 = scmp.lt.s32.totalorder %s27, 1
      %s397 = scalar_select %p396, %s27, 1
      %p398 = scmp.lt.s32.totalorder %s28, 0
      %s399 = scalar_select %p398, %s28, 0
      %s400 = sadd.s32 %s399, %s397
      %s401 = smul.addr %s400, 8
      %s402 = scalar_lea.vmem %s0, %s401
      %p403 = pneg %p58
      %p404 = pneg %p55
      %p405 = scmp.lt.s32.totalorder %s27, 1
      %s406 = scalar_select %p405, %s27, 1
      %p407 = scmp.lt.s32.totalorder %s28, 0
      %s408 = scalar_select %p407, %s28, 0
      %s409 = sadd.s32 %s408, %s406
      %s410 = smul.addr %s409, 8
      %s411 = scalar_lea.vmem %s1, %s410
      %p412 = pneg %p86
      %p413 = pneg %p83
      %p414 = pneg %p107
      %p415 = pneg %p104
      %p416 = pneg %p128
      %p417 = pneg %p125
      %p418 = pneg %p149
      %p419 = pneg %p146
      %p420 = pneg %p170
      %p421 = pneg %p167
      %p422 = pneg %p198
      %p423 = pneg %p195
      %p424 = scmp.lt.s32.totalorder %s27, 1
      %s425 = scalar_select %p424, %s27, 1
      %p426 = scmp.lt.s32.totalorder %s28, 0
      %s427 = scalar_select %p426, %s28, 0
      %s428 = sadd.s32 %s427, %s425
      %s429 = smul.addr %s428, 8
      %s430 = scalar_lea.vmem %s6, %s429
      %p431 = pneg %p226
      %p432 = pneg %p223
      %p433 = scmp.lt.s32.totalorder %s27, 1
      %s434 = scalar_select %p433, %s27, 1
      %p435 = scmp.lt.s32.totalorder %s28, 0
      %s436 = scalar_select %p435, %s28, 0
      %s437 = sadd.s32 %s436, %s434
      %s438 = smul.addr %s437, 8
      %s439 = scalar_lea.vmem %s7, %s438
      %p440 = pneg %p254
      %p441 = pneg %p251
      %p442 = scmp.lt.s32.totalorder %s27, 1
      %s443 = scalar_select %p442, %s27, 1
      %p444 = scmp.lt.s32.totalorder %s28, 0
      %s445 = scalar_select %p444, %s28, 0
      %s446 = sadd.s32 %s445, %s443
      %s447 = smul.addr %s446, 8
      %s448 = scalar_lea.vmem %s8, %s447
      %p449 = pneg %p282
      %p450 = pneg %p279
      %p451 = scmp.lt.s32.totalorder %s27, 1
      %s452 = scalar_select %p451, %s27, 1
      %p453 = scmp.lt.s32.totalorder %s28, 0
      %s454 = scalar_select %p453, %s28, 0
      %s455 = sadd.s32 %s454, %s452
      %s456 = smul.addr %s455, 8
      %s457 = scalar_lea.vmem %s9, %s456
      %p458 = pneg %p310
      %p459 = pneg %p307
      %p460 = scmp.lt.s32.totalorder %s27, 1
      %s461 = scalar_select %p460, %s27, 1
      %p462 = scmp.lt.s32.totalorder %s28, 0
      %s463 = scalar_select %p462, %s28, 0
      %s464 = sadd.s32 %s463, %s461
      %s465 = smul.addr %s464, 8
      %s466 = scalar_lea.vmem %s10, %s465
      %p467 = pneg %p338
      %p468 = pneg %p335
      %p469 = scmp.lt.s32.totalorder %s27, 1
      %s470 = scalar_select %p469, %s27, 1
      %p471 = scmp.lt.s32.totalorder %s28, 0
      %s472 = scalar_select %p471, %s28, 0
      %s473 = sadd.s32 %s472, %s470
      %s474 = smul.addr %s473, 8
      %s475 = scalar_lea.vmem %s11, %s474
      %p476 = scmp.lt.s32.totalorder %s27, 1
      %s477 = scalar_select %p476, %s27, 1
      %p478 = scmp.lt.s32.totalorder %s28, 0
      %s479 = scalar_select %p478, %s28, 0
      %s480 = sadd.s32 %s479, %s477
      %s481 = smul.addr %s480, 8
      %s482 = scalar_lea.vmem %s0, %s481
      %p483 = scmp.lt.s32.totalorder %s27, 1
      %s484 = scalar_select %p483, %s27, 1
      %p485 = scmp.lt.s32.totalorder %s28, 0
      %s486 = scalar_select %p485, %s28, 0
      %s487 = sadd.s32 %s486, %s484
      %s488 = smul.addr %s487, 8
      %s489 = scalar_lea.vmem %s1, %s488
      %p490 = scmp.lt.s32.totalorder %s27, 1
      %s491 = scalar_select %p490, %s27, 1
      %p492 = scmp.lt.s32.totalorder %s28, 0
      %s493 = scalar_select %p492, %s28, 0
      %s494 = sadd.s32 %s493, %s491
      %s495 = smul.addr %s494, 8
      %s496 = scalar_lea.vmem %s6, %s495
      %p497 = scmp.lt.s32.totalorder %s27, 1
      %s498 = scalar_select %p497, %s27, 1
      %p499 = scmp.lt.s32.totalorder %s28, 0
      %s500 = scalar_select %p499, %s28, 0
      %s501 = sadd.s32 %s500, %s498
      %s502 = smul.addr %s501, 8
      %s503 = scalar_lea.vmem %s7, %s502
      %p504 = scmp.lt.s32.totalorder %s27, 1
      %s505 = scalar_select %p504, %s27, 1
      %p506 = scmp.lt.s32.totalorder %s28, 0
      %s507 = scalar_select %p506, %s28, 0
      %s508 = sadd.s32 %s507, %s505
      %s509 = smul.addr %s508, 8
      %s510 = scalar_lea.vmem %s8, %s509
      %p511 = scmp.lt.s32.totalorder %s27, 1
      %s512 = scalar_select %p511, %s27, 1
      %p513 = scmp.lt.s32.totalorder %s28, 0
      %s514 = scalar_select %p513, %s28, 0
      %s515 = sadd.s32 %s514, %s512
      %s516 = smul.addr %s515, 8
      %s517 = scalar_lea.vmem %s9, %s516
      %p518 = scmp.lt.s32.totalorder %s27, 1
      %s519 = scalar_select %p518, %s27, 1
      %p520 = scmp.lt.s32.totalorder %s28, 0
      %s521 = scalar_select %p520, %s28, 0
      %s522 = sadd.s32 %s521, %s519
      %s523 = smul.addr %s522, 8
      %s524 = scalar_lea.vmem %s10, %s523
      %p525 = scmp.lt.s32.totalorder %s27, 1
      %s526 = scalar_select %p525, %s27, 1
      %p527 = scmp.lt.s32.totalorder %s28, 0
      %s528 = scalar_select %p527, %s28, 0
      %s529 = sadd.s32 %s528, %s526
      %s530 = smul.addr %s529, 8
      %s531 = scalar_lea.vmem %s11, %s530
      %v532 = vld [vmem:[%s482] sm:$0x1f]
      %v533 = vld [vmem:[%s2] sm:$0xf]
      %v534 = vld [vmem:[%s3] sm:$0x1]
      %v536 = vlaneseq
      %v537 = vshrl.u32 %v536, 7
      %v538 = vsub.s32 0, %v537
      %v539 = vrot.slane %v534, %v538
      %vm541 = vcmask 31744
      %v543 = vsel %vm541, %v532, 0
      %vm545 = vcmask 1043456
      %v547 = vsel %vm545, %v533, 0
      %549 = vmatprep.subr.mxu0 0.0
      %550 = vmatpush1.msra.mxu0 %v547
      %551 = vmatprep.subr.mxu0 0.0
      %552 = vmatpush1.msra.mxu0 0.0
      %553 = vmatprep.subr.mxu0 0.0
      %554 = vmatpush1.msra.mxu0 0.0
      %555 = vmatprep.subr.mxu0 0.0
      %556 = vmatpush1.msra.mxu0 0.0
      %557 = vmatprep.subr.mxu0 0.0
      %558 = vmatpush1.msra.mxu0 0.0
      %559 = vmatprep.subr.mxu0 0.0
      %560 = vmatpush1.msra.mxu0 0.0
      %561 = vmatprep.subr.mxu0 0.0
      %562 = vmatpush1.msra.mxu0 0.0
      %563 = vmatprep.subr.mxu0 0.0
      %564 = vmatpush1.msra.mxu0 0.0
      %565 = vmatprep.subr.mxu0 0.0
      %566 = vmatpush1.msra.mxu0 0.0
      %567 = vmatprep.subr.mxu0 0.0
      %568 = vmatpush1.msra.mxu0 0.0
      %569 = vmatprep.subr.mxu0 0.0
      %570 = vmatpush1.msra.mxu0 0.0
      %571 = vmatprep.subr.mxu0 0.0
      %572 = vmatpush1.msra.mxu0 0.0
      %573 = vmatprep.subr.mxu0 0.0
      %574 = vmatpush1.msra.mxu0 0.0
      %575 = vmatprep.subr.mxu0 0.0
      %576 = vmatpush1.msra.mxu0 0.0
      %577 = vmatprep.subr.mxu0 0.0
      %578 = vmatpush1.msra.mxu0 0.0
      %579 = vmatprep.subr.mxu0 0.0
      %580 = vmatpush1.msra.mxu0 0.0
      %581 = vmatprep.subr.mxu0 0.0
      %582 = vmatpush1.msra.mxu0 0.0
      %583 = vmatprep.subr.mxu0 0.0
      %584 = vmatpush1.msra.mxu0 0.0
      %585 = vmatprep.subr.mxu0 0.0
      %586 = vmatpush1.msra.mxu0 0.0
      %587 = vmatprep.subr.mxu0 0.0
      %588 = vmatpush1.msra.mxu0 0.0
      %589 = vmatprep.subr.mxu0 0.0
      %590 = vmatpush1.msra.mxu0 0.0
      %591 = vmatprep.subr.mxu0 0.0
      %592 = vmatpush1.msra.mxu0 0.0
      %593 = vmatprep.subr.mxu0 0.0
      %594 = vmatpush1.msra.mxu0 0.0
      %595 = vmatprep.subr.mxu0 0.0
      %596 = vmatpush1.msra.mxu0 0.0
      %597 = vmatprep.subr.mxu0 0.0
      %598 = vmatpush1.msra.mxu0 0.0
      %599 = vmatprep.subr.mxu0 0.0
      %600 = vmatpush1.msra.mxu0 0.0
      %601 = vmatprep.subr.mxu0 0.0
      %602 = vmatpush1.msra.mxu0 0.0
      %603 = vmatprep.subr.mxu0 0.0
      %604 = vmatpush1.msra.mxu0 0.0
      %605 = vmatprep.subr.mxu0 0.0
      %606 = vmatpush1.msra.mxu0 0.0
      %607 = vmatprep.subr.mxu0 0.0
      %608 = vmatpush1.msra.mxu0 0.0
      %609 = vmatprep.subr.mxu0 0.0
      %610 = vmatpush1.msra.mxu0 0.0
      %611 = vmatprep.subr.mxu0 0.0
      %612 = vmatpush1.msra.mxu0 0.0
      %613 = vmatprep.mubr.f32.mxu0 0.0
      %614 = vmatmul.mubr.f32.gmra.mrb[0].mxu0 %v543
      %v615 = vpop.f32.mrb[0].mxu0
      %v616 = vadd.f32 %v539, %v615
      %v617 = vpop.f32.mrb[0].mxu0
      %618 = vdwg.mxu0
      %v619 = vld [vmem:[%s489] sm:$0x1f]
      %v620 = vld [vmem:[%s4] sm:$0xf]
      %v621 = vld [vmem:[%s5] sm:$0x1]
      %v623 = vlaneseq
      %v624 = vshrl.u32 %v623, 7
      %v625 = vsub.s32 0, %v624
      %v626 = vrot.slane %v621, %v625
      %v629 = vsel %vm541, %v619, 0
      %v632 = vsel %vm545, %v620, 0
      %634 = vmatprep.subr.mxu0 0.0
      %635 = vmatpush1.msra.mxu0 %v632
      %636 = vmatprep.subr.mxu0 0.0
      %637 = vmatpush1.msra.mxu0 0.0
      %638 = vmatprep.subr.mxu0 0.0
      %639 = vmatpush1.msra.mxu0 0.0
      %640 = vmatprep.subr.mxu0 0.0
      %641 = vmatpush1.msra.mxu0 0.0
      %642 = vmatprep.subr.mxu0 0.0
      %643 = vmatpush1.msra.mxu0 0.0
      %644 = vmatprep.subr.mxu0 0.0
      %645 = vmatpush1.msra.mxu0 0.0
      %646 = vmatprep.subr.mxu0 0.0
      %647 = vmatpush1.msra.mxu0 0.0
      %648 = vmatprep.subr.mxu0 0.0
      %649 = vmatpush1.msra.mxu0 0.0
      %650 = vmatprep.subr.mxu0 0.0
      %651 = vmatpush1.msra.mxu0 0.0
      %652 = vmatprep.subr.mxu0 0.0
      %653 = vmatpush1.msra.mxu0 0.0
      %654 = vmatprep.subr.mxu0 0.0
      %655 = vmatpush1.msra.mxu0 0.0
      %656 = vmatprep.subr.mxu0 0.0
      %657 = vmatpush1.msra.mxu0 0.0
      %658 = vmatprep.subr.mxu0 0.0
      %659 = vmatpush1.msra.mxu0 0.0
      %660 = vmatprep.subr.mxu0 0.0
      %661 = vmatpush1.msra.mxu0 0.0
      %662 = vmatprep.subr.mxu0 0.0
      %663 = vmatpush1.msra.mxu0 0.0
      %664 = vmatprep.subr.mxu0 0.0
      %665 = vmatpush1.msra.mxu0 0.0
      %666 = vmatprep.subr.mxu0 0.0
      %667 = vmatpush1.msra.mxu0 0.0
      %668 = vmatprep.subr.mxu0 0.0
      %669 = vmatpush1.msra.mxu0 0.0
      %670 = vmatprep.subr.mxu0 0.0
      %671 = vmatpush1.msra.mxu0 0.0
      %672 = vmatprep.subr.mxu0 0.0
      %673 = vmatpush1.msra.mxu0 0.0
      %674 = vmatprep.subr.mxu0 0.0
      %675 = vmatpush1.msra.mxu0 0.0
      %676 = vmatprep.subr.mxu0 0.0
      %677 = vmatpush1.msra.mxu0 0.0
      %678 = vmatprep.subr.mxu0 0.0
      %679 = vmatpush1.msra.mxu0 0.0
      %680 = vmatprep.subr.mxu0 0.0
      %681 = vmatpush1.msra.mxu0 0.0
      %682 = vmatprep.subr.mxu0 0.0
      %683 = vmatpush1.msra.mxu0 0.0
      %684 = vmatprep.subr.mxu0 0.0
      %685 = vmatpush1.msra.mxu0 0.0
      %686 = vmatprep.subr.mxu0 0.0
      %687 = vmatpush1.msra.mxu0 0.0
      %688 = vmatprep.subr.mxu0 0.0
      %689 = vmatpush1.msra.mxu0 0.0
      %690 = vmatprep.subr.mxu0 0.0
      %691 = vmatpush1.msra.mxu0 0.0
      %692 = vmatprep.subr.mxu0 0.0
      %693 = vmatpush1.msra.mxu0 0.0
      %694 = vmatprep.subr.mxu0 0.0
      %695 = vmatpush1.msra.mxu0 0.0
      %696 = vmatprep.subr.mxu0 0.0
      %697 = vmatpush1.msra.mxu0 0.0
      %698 = vmatprep.mubr.f32.mxu0 0.0
      %699 = vmatmul.mubr.f32.gmra.mrb[0].mxu0 %v629
      %v700 = vpop.f32.mrb[0].mxu0
      %v701 = vadd.f32 %v626, %v700
      %v702 = vpop.f32.mrb[0].mxu0
      %703 = vdwg.mxu0
      %vm704 = vcmask 28672
      %705 = vst.msk [vmem:[%s496] sm:$0x1f] %vm704, %v616
      %707 = vrot.lane.b32.xlu0 %v616, 124
      %v708 = vpop.permute.xlu0 %707
      %710 = vst.msk [vmem:[%s503] sm:$0x1f] %vm704, %v708
      %711 = vrot.lane.b32.xlu0 %v616, 120
      %v712 = vpop.permute.xlu0 %711
      %714 = vst.msk [vmem:[%s510] sm:$0x1f] %vm704, %v712
      %715 = vst.msk [vmem:[%s517] sm:$0x1f] %vm704, %v701
      %717 = vrot.lane.b32.xlu0 %v701, 124
      %v718 = vpop.permute.xlu0 %717
      %720 = vst.msk [vmem:[%s524] sm:$0x1f] %vm704, %v718
      %721 = vrot.lane.b32.xlu0 %v701, 120
      %v722 = vpop.permute.xlu0 %721
      %724 = vst.msk [vmem:[%s531] sm:$0x1f] %vm704, %v722
      %p725 = scmp.lt.s32.totalorder %s27, 1
      %s726 = scalar_select %p725, %s27, 1
      %p727 = scmp.lt.s32.totalorder %s28, 0
      %s728 = scalar_select %p727, %s28, 0
      %s729 = sadd.s32 %s728, %s726
      %s730 = smul.addr %s729, 8
      %s731 = scalar_lea.vmem %s6, %s730
      %p732 = scmp.lt.s32.totalorder %s27, 1
      %s733 = scalar_select %p732, %s27, 1
      %p734 = scmp.lt.s32.totalorder %s28, 0
      %s735 = scalar_select %p734, %s28, 0
      %s736 = sadd.s32 %s735, %s733
      %s737 = smul.addr %s736, 8
      %s738 = scalar_lea.vmem %s7, %s737
      %p739 = scmp.lt.s32.totalorder %s27, 1
      %s740 = scalar_select %p739, %s27, 1
      %p741 = scmp.lt.s32.totalorder %s28, 0
      %s742 = scalar_select %p741, %s28, 0
      %s743 = sadd.s32 %s742, %s740
      %s744 = smul.addr %s743, 8
      %s745 = scalar_lea.vmem %s8, %s744
      %p746 = scmp.lt.s32.totalorder %s27, 1
      %s747 = scalar_select %p746, %s27, 1
      %p748 = scmp.lt.s32.totalorder %s28, 0
      %s749 = scalar_select %p748, %s28, 0
      %s750 = sadd.s32 %s749, %s747
      %s751 = smul.addr %s750, 8
      %s752 = scalar_lea.vmem %s9, %s751
      %p753 = scmp.lt.s32.totalorder %s27, 1
      %s754 = scalar_select %p753, %s27, 1
      %p755 = scmp.lt.s32.totalorder %s28, 0
      %s756 = scalar_select %p755, %s28, 0
      %s757 = sadd.s32 %s756, %s754
      %s758 = smul.addr %s757, 8
      %s759 = scalar_lea.vmem %s10, %s758
      %p760 = scmp.lt.s32.totalorder %s27, 1
      %s761 = scalar_select %p760, %s27, 1
      %p762 = scmp.lt.s32.totalorder %s28, 0
      %s763 = scalar_select %p762, %s28, 0
      %s764 = sadd.s32 %s763, %s761
      %s765 = smul.addr %s764, 8
      %s766 = scalar_lea.vmem %s11, %s765
      // Predicated region
      $region45: #{tpu_custom_call.1} parent=43 // pred_check
        %p767 = pneg %p195
      $region46: #{tpu_custom_call.1} parent=43 // pred_check_branch
        %769 = sbr.rel (%p767) target = $region48
      $region47: #{tpu_custom_call.1} parent=43 // pred_region
        _
      $region48: #{tpu_custom_call.1} parent=43 // pred_fallthru
        _
      // Predicated region
      $region49: #{tpu_custom_call.1} parent=43 // pred_check
        %p770 = pneg %p223
      $region50: #{tpu_custom_call.1} parent=43 // pred_check_branch
        %772 = sbr.rel (%p770) target = $region52
      $region51: #{tpu_custom_call.1} parent=43 // pred_region
        _
      $region52: #{tpu_custom_call.1} parent=43 // pred_fallthru
        _
      // Predicated region
      $region53: #{tpu_custom_call.1} parent=43 // pred_check
        %p773 = pneg %p251
      $region54: #{tpu_custom_call.1} parent=43 // pred_check_branch
        %775 = sbr.rel (%p773) target = $region56
      $region55: #{tpu_custom_call.1} parent=43 // pred_region
        _
      $region56: #{tpu_custom_call.1} parent=43 // pred_fallthru
        _
      // Predicated region
      $region57: #{tpu_custom_call.1} parent=43 // pred_check
        %p776 = pneg %p279
      $region58: #{tpu_custom_call.1} parent=43 // pred_check_branch
        %778 = sbr.rel (%p776) target = $region60
      $region59: #{tpu_custom_call.1} parent=43 // pred_region
        _
      $region60: #{tpu_custom_call.1} parent=43 // pred_fallthru
        _
      // Predicated region
      $region61: #{tpu_custom_call.1} parent=43 // pred_check
        %p779 = pneg %p307
      $region62: #{tpu_custom_call.1} parent=43 // pred_check_branch
        %781 = sbr.rel (%p779) target = $region64
      $region63: #{tpu_custom_call.1} parent=43 // pred_region
        _
      $region64: #{tpu_custom_call.1} parent=43 // pred_fallthru
        _
      // Predicated region
      $region65: #{tpu_custom_call.1} parent=43 // pred_check
        %p782 = pneg %p335
      $region66: #{tpu_custom_call.1} parent=43 // pred_check_branch
        %784 = sbr.rel (%p782) target = $region68
      $region67: #{tpu_custom_call.1} parent=43 // pred_region
        _
      $region68: #{tpu_custom_call.1} parent=43 // pred_fallthru
        _
    $region44: #{tpu_custom_call.1} parent=5 // pred_fallthru
      _
    %p785 = scmp.le.s32.totalorder 2, %s18
    // Predicated region
    $region69: #{tpu_custom_call.1} parent=5 // pred_check
      %p786 = pneg %p785
    $region70: #{tpu_custom_call.1} parent=5 // pred_check_branch
      %788 = sbr.rel (%p786) target = $region72
    $region71: #{tpu_custom_call.1} parent=5 // pred_region
      %s789 = ssub.s32 %s18, 2
      // Predicated region
      $region73: #{tpu_custom_call.1} parent=71 // pred_check
        %p790 = pneg %p201
      $region74: #{tpu_custom_call.1} parent=71 // pred_check_branch
        %792 = sbr.rel (%p790) target = $region76
      $region75: #{tpu_custom_call.1} parent=71 // pred_region
        %p793 = scmp.lt.s32.totalorder %s29, 1
        %s794 = scalar_select %p793, %s29, 1
        %p795 = scmp.lt.s32.totalorder %s30, 0
        %s796 = scalar_select %p795, %s30, 0
        %s797 = sadd.s32 %s796, %s794
        %s798 = smul.addr %s797, 8
        %s799 = scalar_lea.vmem %s6, %s798
      $region76: #{tpu_custom_call.1} parent=71 // pred_fallthru
        _
      // Predicated region
      $region77: #{tpu_custom_call.1} parent=71 // pred_check
        %p800 = pneg %p229
      $region78: #{tpu_custom_call.1} parent=71 // pred_check_branch
        %802 = sbr.rel (%p800) target = $region80
      $region79: #{tpu_custom_call.1} parent=71 // pred_region
        %p803 = scmp.lt.s32.totalorder %s29, 1
        %s804 = scalar_select %p803, %s29, 1
        %p805 = scmp.lt.s32.totalorder %s30, 0
        %s806 = scalar_select %p805, %s30, 0
        %s807 = sadd.s32 %s806, %s804
        %s808 = smul.addr %s807, 8
        %s809 = scalar_lea.vmem %s7, %s808
      $region80: #{tpu_custom_call.1} parent=71 // pred_fallthru
        _
      // Predicated region
      $region81: #{tpu_custom_call.1} parent=71 // pred_check
        %p810 = pneg %p257
      $region82: #{tpu_custom_call.1} parent=71 // pred_check_branch
        %812 = sbr.rel (%p810) target = $region84
      $region83: #{tpu_custom_call.1} parent=71 // pred_region
        %p813 = scmp.lt.s32.totalorder %s29, 1
        %s814 = scalar_select %p813, %s29, 1
        %p815 = scmp.lt.s32.totalorder %s30, 0
        %s816 = scalar_select %p815, %s30, 0
        %s817 = sadd.s32 %s816, %s814
        %s818 = smul.addr %s817, 8
        %s819 = scalar_lea.vmem %s8, %s818
      $region84: #{tpu_custom_call.1} parent=71 // pred_fallthru
        _
      // Predicated region
      $region85: #{tpu_custom_call.1} parent=71 // pred_check
        %p820 = pneg %p285
      $region86: #{tpu_custom_call.1} parent=71 // pred_check_branch
        %822 = sbr.rel (%p820) target = $region88
      $region87: #{tpu_custom_call.1} parent=71 // pred_region
        %p823 = scmp.lt.s32.totalorder %s29, 1
        %s824 = scalar_select %p823, %s29, 1
        %p825 = scmp.lt.s32.totalorder %s30, 0
        %s826 = scalar_select %p825, %s30, 0
        %s827 = sadd.s32 %s826, %s824
        %s828 = smul.addr %s827, 8
        %s829 = scalar_lea.vmem %s9, %s828
      $region88: #{tpu_custom_call.1} parent=71 // pred_fallthru
        _
      // Predicated region
      $region89: #{tpu_custom_call.1} parent=71 // pred_check
        %p830 = pneg %p313
      $region90: #{tpu_custom_call.1} parent=71 // pred_check_branch
        %832 = sbr.rel (%p830) target = $region92
      $region91: #{tpu_custom_call.1} parent=71 // pred_region
        %p833 = scmp.lt.s32.totalorder %s29, 1
        %s834 = scalar_select %p833, %s29, 1
        %p835 = scmp.lt.s32.totalorder %s30, 0
        %s836 = scalar_select %p835, %s30, 0
        %s837 = sadd.s32 %s836, %s834
        %s838 = smul.addr %s837, 8
        %s839 = scalar_lea.vmem %s10, %s838
      $region92: #{tpu_custom_call.1} parent=71 // pred_fallthru
        _
      // Predicated region
      $region93: #{tpu_custom_call.1} parent=71 // pred_check
        %p840 = pneg %p341
      $region94: #{tpu_custom_call.1} parent=71 // pred_check_branch
        %842 = sbr.rel (%p840) target = $region96
      $region95: #{tpu_custom_call.1} parent=71 // pred_region
        %p843 = scmp.lt.s32.totalorder %s29, 1
        %s844 = scalar_select %p843, %s29, 1
        %p845 = scmp.lt.s32.totalorder %s30, 0
        %s846 = scalar_select %p845, %s30, 0
        %s847 = sadd.s32 %s846, %s844
        %s848 = smul.addr %s847, 8
        %s849 = scalar_lea.vmem %s11, %s848
      $region96: #{tpu_custom_call.1} parent=71 // pred_fallthru
        _
    $region72: #{tpu_custom_call.1} parent=5 // pred_fallthru
      _
  $region6: #{tpu_custom_call.1} parent=0 // loop_footer
    %s22 = sadd.s32 1, %s18
  $region7: #{tpu_custom_call.1} parent=0 // loop_footer_branch
    %17 = sbr.rel target = $region3
  $region8: #{tpu_custom_call.1} parent=0 // loop_exit
    _

</llo_original>
